<compile_context>
chip_gen: v7x
topology: tpu7x:2x2x1
jax: 0.10.0
libtpu: 0.0.40
codegen_flags: <defaults>
</compile_context>

<pallas_src>
import functools

import jax
import jax.numpy as jnp
import numpy as np
from jax.experimental import pallas as pl
from jax.experimental.pallas import tpu as pltpu


# ----------------------------------------------------------------------------
# One-off probe of pltpu.roll's rotate direction (cached).  pltpu.roll is
# documented to match jnp.roll; this makes the in-kernel im2col robust to
# either convention.  Runs eagerly, before any jit of the forward.
# ----------------------------------------------------------------------------
_ROLL_SIGN = None


def _lane_roll_sign():
    global _ROLL_SIGN
    if _ROLL_SIGN is None:
        def probe(x_ref, o_ref):
            o_ref[...] = pltpu.roll(x_ref[...], 1, axis=1)

        vmem = pl.BlockSpec(memory_space=pltpu.MemorySpace.VMEM)
        x = jnp.broadcast_to(jnp.arange(128, dtype=jnp.float32)[None, :], (8, 128))
        y = pl.pallas_call(
            probe,
            out_shape=jax.ShapeDtypeStruct((8, 128), jnp.float32),
            in_specs=[vmem],
            out_specs=vmem,
        )(x)
        # jnp.roll semantics: element 0 moves to index 1  ->  y[0, 1] == 0.
        _ROLL_SIGN = 1 if float(y[0, 1]) == 0.0 else -1
    return _ROLL_SIGN


# ----------------------------------------------------------------------------
# Fused block-group kernel.
#   refs = [x_in, tap_masks, *flat_block_params..., out_ref]
#   x_in:      downsample: (9, Cin, M) bf16 pre-gathered strided taps of the group input
#              else:       (Cin, M)    bf16 group input in (C, M) layout
#   tap_masks: (9, 1, M) bf16 validity masks for 3x3/stride-1/pad-1 taps
#   3x3 weights: (9, Cout, Cin) bf16 (per-tap); 1x1 weight: (Cout, Cin) bf16
#   gamma/beta: (Cout, 1) f32
#   out_ref:   (Cout, M)
# ----------------------------------------------------------------------------
def _block_group_kernel(*refs, n_blocks, downsample, Wo, eps, compute_dtype,
                        roll_sign, mask_trivial):
    out_ref = refs[-1]
    x_ref, mask_ref = refs[0], refs[1]
    M = out_ref.shape[1]
    inv_m = 1.0 / M

    def bn(y, g_ref, b_ref):
        # BatchNorm2d, training mode: batch stats over (N, H, W) == lane axis.
        # One-pass stats: var = E[y^2] - mean^2 (mild f32 cancellation is fine here).
        mean = jnp.sum(y, axis=1, keepdims=True) * inv_m
        ex2 = jnp.sum(y * y, axis=1, keepdims=True) * inv_m
        var = ex2 - mean * mean
        return (y - mean) * jax.lax.rsqrt(var + eps) * g_ref[...] + b_ref[...]

    def relu(y):
        return jnp.maximum(y, 0.0)

    def conv3x3(act_f32, w_ref):
        # 3x3 / stride-1 / pad-1 conv as 9 accumulated partial MXU matmuls (K = C each).
        # Taps are built in-register: cast to bf16 once, XLU lane-rotate, mask only where
        # the boundary mask is non-trivial; nothing round-trips HBM or VMEM slabs.
        a = act_f32.astype(compute_dtype)
        acc = None
        t = 0
        for oh in (-1, 0, 1):
            for ow in (-1, 0, 1):
                d = oh * Wo + ow
                tap = a if d == 0 else pltpu.roll(a, (-d * roll_sign) % M, axis=1)
                if not mask_trivial[t]:
                    tap = tap * mask_ref[t]
                part = jnp.dot(w_ref[t], tap, preferred_element_type=jnp.float32)
                acc = part if acc is None else acc + part
                t += 1
        return acc

    idx = 2
    if downsample:
        w1, wr, w2, g1, b1, gr, br, g2, b2 = refs[idx:idx + 9]
        idx += 9
        # Left branch, first (strided) conv: 9 pre-gathered taps -> 9 partial matmuls.
        acc = None
        for t in range(9):
            part = jnp.dot(w1[t], x_ref[t], preferred_element_type=jnp.float32)
            acc = part if acc is None else acc + part
        h = relu(bn(acc, g1, b1))
        y = bn(conv3x3(h, w2), g2, b2)
        # Right branch: the 1x1/stride-s conv reads exactly the centre tap.
        r = bn(jnp.dot(wr[...], x_ref[4], preferred_element_type=jnp.float32), gr, br)
        act = relu(y + r)
        start = 1
    else:
        act = x_ref[...].astype(jnp.float32)                     # identity residual
        start = 0

    for _ in range(start, n_blocks):
        w1, w2, g1, b1, g2, b2 = refs[idx:idx + 6]
        idx += 6
        h = relu(bn(conv3x3(act, w1), g1, b1))
        y = bn(conv3x3(h, w2), g2, b2)
        act = relu(y + act)                                      # identity residual

    out_ref[...] = act.astype(out_ref.dtype)


# ----------------------------------------------------------------------------
# Wrapper: NCHW in; NCHW out by default ("cm" keeps the lane-dense (C, M) layout).
# ----------------------------------------------------------------------------
def _tap_masks(N, Ho, Wo, dtype):
    m = np.arange(N * Ho * Wo)
    i = (m // Wo) % Ho
    j = m % Wo
    masks = []
    for oh in (-1, 0, 1):
        for ow in (-1, 0, 1):
            ok = (i + oh >= 0) & (i + oh < Ho) & (j + ow >= 0) & (j + ow < Wo)
            masks.append(ok)
    masks = np.stack(masks, 0)
    trivial = tuple(bool(mm.all()) for mm in masks)              # centre tap is all-ones
    arr = jnp.asarray(masks.astype(np.float32).reshape(9, 1, -1)).astype(dtype)
    return arr, trivial


def _flatten_block_params(p, with_downsample):
    names = (("w1", "wr", "w2", "g1", "b1", "gr", "br", "g2", "b2")
             if with_downsample else ("w1", "w2", "g1", "b1", "g2", "b2"))
    return [p[n] for n in names]


def block_group_forward(x_nchw, params, first_stride, *, eps=1e-5,
                        compute_dtype=jnp.bfloat16, out_layout="nchw",
                        out_dtype=jnp.float32):
    roll_sign = _lane_roll_sign()            # resolved eagerly, cached
    N, Cin, H, W = x_nchw.shape
    n_blocks = len(params)
    downsample = first_stride > 1
    Cout = params[0]["g1"].shape[0]
    s = first_stride
    Ho = (H + 2 - 3) // s + 1
    Wo = (W + 2 - 3) // s + 1
    M = N * Ho * Wo

    if downsample:
        # Pre-gather the 9 strided taps of the group input (pure data movement); kept as
        # a stacked (9, Cin, M) bf16 array.  K ordered (kh, kw), M ordered (n, i, j).
        xp = jnp.pad(x_nchw, ((0, 0), (0, 0), (1, 1), (1, 1)))
        taps = []
        for kh in range(3):
            for kw in range(3):
                sl = xp[:, :, kh:kh + s * (Ho - 1) + 1:s,
                              kw:kw + s * (Wo - 1) + 1:s]        # (N, Cin, Ho, Wo)
                taps.append(jnp.transpose(sl, (1, 0, 2, 3)).reshape(Cin, M))
        x_in = jnp.stack(taps, axis=0).astype(compute_dtype)     # (9, Cin, M)
    else:
        x_in = (jnp.transpose(x_nchw, (1, 0, 2, 3))
                .reshape(Cin, M).astype(compute_dtype))          # bf16 input DMA

    mask, mask_trivial = _tap_masks(N, Ho, Wo, compute_dtype)

    flat = []
    for i, p in enumerate(params):
        flat += _flatten_block_params(p, downsample and i == 0)

    kernel = functools.partial(
        _block_group_kernel, n_blocks=n_blocks, downsample=downsample,
        Wo=Wo, eps=eps, compute_dtype=compute_dtype, roll_sign=roll_sign,
        mask_trivial=mask_trivial)

    vmem = pl.BlockSpec(memory_space=pltpu.MemorySpace.VMEM)
    inputs = [x_in, mask] + flat

    # Explicit VMEM budget: generous headroom for the f32 intermediates, capped below
    # v7x's 64 MiB physical VMEM (and well inside v5e/v6e's 128 MiB).
    io_bytes = sum(int(np.prod(a.shape)) * np.dtype(a.dtype).itemsize for a in inputs)
    io_bytes += Cout * M * np.dtype(out_dtype).itemsize
    vmem_limit = int(min(48 << 20, max(32 << 20, 8 * io_bytes)))

    out_cm = pl.pallas_call(
        kernel,
        out_shape=jax.ShapeDtypeStruct((Cout, M), out_dtype),
        in_specs=[vmem] * len(inputs),
        out_specs=vmem,
        compiler_params=pltpu.CompilerParams(vmem_limit_bytes=vmem_limit),
    )(*inputs)

    if out_layout == "cm":
        return out_cm                                            # (Cout, M=(n,i,j))
    # (Cout, M=(n,i,j)) -> NCHW at the module boundary.
    return jnp.transpose(out_cm.reshape(Cout, N, Ho, Wo), (1, 0, 2, 3))


# ----------------------------------------------------------------------------
# Parameter init: deterministic, mirrors PyTorch shapes/scales.  3x3 weights are
# split ONCE here into the kernel's per-tap (9, Cout, Cin) bf16 layout.
# ----------------------------------------------------------------------------
def _init_conv_oihw(key, in_c, out_c, k):
    sf = 1.0 / np.sqrt(in_c * k * k)
    return jax.random.uniform(key, (out_c, in_c, k, k), dtype=jnp.float32,
                              minval=-sf, maxval=sf)


def _prep_weight_taps(w_oihw, compute_dtype):
    # (O, I, 3, 3) -> (9, O, I); tap t = kh*3 + kw, matching the (oh, ow) roll order
    # in the kernel (oh = kh - 1, ow = kw - 1).
    o, i, kh, kw = w_oihw.shape
    return (jnp.transpose(w_oihw, (2, 3, 0, 1))
            .reshape(kh * kw, o, i).astype(compute_dtype))


def _prep_weight_1x1(w_oihw, compute_dtype):
    o, i, _, _ = w_oihw.shape
    return w_oihw.reshape(o, i).astype(compute_dtype)


def init_residual_block(key, in_feats, out_feats, first_stride,
                        compute_dtype=jnp.bfloat16):
    k1, k2, k3 = jax.random.split(key, 3)
    w1 = _init_conv_oihw(k1, in_feats, out_feats, 3)
    w2 = _init_conv_oihw(k2, out_feats, out_feats, 3)
    p = {
        "w1": _prep_weight_taps(w1, compute_dtype), "w1_f32": w1,
        "g1": jnp.ones((out_feats, 1), jnp.float32),
        "b1": jnp.zeros((out_feats, 1), jnp.float32),
        "w2": _prep_weight_taps(w2, compute_dtype), "w2_f32": w2,
        "g2": jnp.ones((out_feats, 1), jnp.float32),
        "b2": jnp.zeros((out_feats, 1), jnp.float32),
    }
    if first_stride > 1:
        wr = _init_conv_oihw(k3, in_feats, out_feats, 1)
        p.update({"wr": _prep_weight_1x1(wr, compute_dtype), "wr_f32": wr,
                  "gr": jnp.ones((out_feats, 1), jnp.float32),
                  "br": jnp.zeros((out_feats, 1), jnp.float32)})
    return p


def init_block_group(key, n_blocks, in_feats, out_feats, first_stride,
                     compute_dtype=jnp.bfloat16):
    keys = jax.random.split(key, n_blocks)
    params = [init_residual_block(keys[0], in_feats, out_feats, first_stride,
                                  compute_dtype)]
    for i in range(1, n_blocks):
        params.append(init_residual_block(keys[i], out_feats, out_feats, 1,
                                          compute_dtype))
    return params


# ----------------------------------------------------------------------------
# Pure-JAX f32 reference (correctness check only)
# ----------------------------------------------------------------------------
def _ref_conv_bn(x, w_oihw, gamma, beta, *, stride, padding, eps=1e-5):
    y = jax.lax.conv_general_dilated(
        x, w_oihw, window_strides=(stride, stride),
        padding=((padding, padding), (padding, padding)),
        dimension_numbers=("NCHW", "OIHW", "NCHW"),
        precision=jax.lax.Precision.HIGHEST)
    mean = jnp.mean(y, axis=(0, 2, 3), keepdims=True)
    var = jnp.mean((y - mean) ** 2, axis=(0, 2, 3), keepdims=True)
    g = gamma.reshape(1, -1, 1, 1)
    b = beta.reshape(1, -1, 1, 1)
    return (y - mean) / jnp.sqrt(var + eps) * g + b


def ref_block_group(x, params, first_stride, eps=1e-5):
    for i, p in enumerate(params):
        s = first_stride if i == 0 else 1
        h = jnp.maximum(_ref_conv_bn(x, p["w1_f32"], p["g1"], p["b1"],
                                     stride=s, padding=1, eps=eps), 0.0)
        y = _ref_conv_bn(h, p["w2_f32"], p["g2"], p["b2"],
                         stride=1, padding=1, eps=eps)
        r = (_ref_conv_bn(x, p["wr_f32"], p["gr"], p["br"],
                          stride=s, padding=0, eps=eps) if s > 1 else x)
        x = jnp.maximum(y + r, 0.0)
    return x


if __name__ == "__main__":
    key = jax.random.PRNGKey(0)
    kx, kp, kx2, kp2 = jax.random.split(key, 4)

    # BlockGroup(n_blocks=2, in_feats=4, out_feats=8, first_stride=2)  (downsample path)
    n_blocks, in_feats, out_feats, first_stride = 2, 4, 8, 2
    x = jax.random.normal(kx, (2, in_feats, 16, 16), dtype=jnp.float32)  # NCHW
    params = init_block_group(kp, n_blocks, in_feats, out_feats, first_stride)

    out = jax.block_until_ready(block_group_forward(x, params, first_stride))
    expected_shape = (2, out_feats, 16 // first_stride, 16 // first_stride)
    assert out.shape == expected_shape, (out.shape, expected_shape)

    ref = jax.block_until_ready(ref_block_group(x, params, first_stride))
    # Tolerance accounts for bf16 MXU operands / bf16-shipped activations;
    # accumulation and all BN math are in f32.
    np.testing.assert_allclose(np.asarray(out), np.asarray(ref),
                               rtol=5e-2, atol=5e-2)

    # BlockGroup(n_blocks=2, in_feats=8, out_feats=8, first_stride=1)  (identity path)
    x2 = jax.random.normal(kx2, (2, 8, 8, 8), dtype=jnp.float32)
    params2 = init_block_group(kp2, 2, 8, 8, 1)
    out2 = jax.block_until_ready(block_group_forward(x2, params2, 1))
    assert out2.shape == (2, 8, 8, 8), out2.shape
    ref2 = jax.block_until_ready(ref_block_group(x2, params2, 1))
    np.testing.assert_allclose(np.asarray(out2), np.asarray(ref2),
                               rtol=5e-2, atol=5e-2)

    print("KERNEL_OK")
</pallas_src>

<mosaic_0001>
module attributes {stable_mosaic.version = 11 : i64} {
  func.func @probe(%arg0: memref<8x128xf32, #tpu.memory_space<vmem>>, %arg1: memref<8x128xf32, #tpu.memory_space<vmem>>) attributes {dimension_semantics = [], scalar_prefetch = 0 : i64, scratch_operands = 0 : i64, tpu.core_type = #tpu.core_type<tc>} {
    %c0 = arith.constant 0 : index
    %c0_0 = arith.constant 0 : index
    %0 = vector.load %arg0[%c0, %c0_0] : memref<8x128xf32, #tpu.memory_space<vmem>>, vector<8x128xf32>
    %c1_i32 = arith.constant 1 : i32
    %1 = tpu.dynamic_rotate %0 by %c1_i32 dim 1 : vector<8x128xf32>, i32 -> vector<8x128xf32>
    %c0_1 = arith.constant 0 : index
    %c0_2 = arith.constant 0 : index
    %2 = vector.load %arg1[%c0_1, %c0_2] : memref<8x128xf32, #tpu.memory_space<vmem>>, vector<8x128xf32>
    tpu.vector_store %arg1[%c0_1, %c0_2], %1 {strides = array<i32>} : memref<8x128xf32, #tpu.memory_space<vmem>>, vector<8x128xf32>,
    return
  }
}

</mosaic_0001>

<llo_original>
// kernel: tpu_custom_call.1
$region0: #{tpu_custom_call.1}
  #allocation0 [shape = 'u32[]', space=smem, size = 0x4, offset = 0x4, fixed_abs, tag = 'smem constant byte address 0x4 - core index']
  #allocation1 [shape = 'u32[144,128]{1,0:T(1,128)}', space=vmem, size = 0x12000, scoped, tag = 'internal scratch']
  %s0 = inlined_call_operand.hbm [shape: f32[8,128], index: 0, kind: input, shape index: {}]
  %s1 = inlined_call_operand.hbm [shape: f32[8,128], index: 1, kind: output, shape index: {}]
  %s2 = sld [smem:[#allocation0]]
  $region18: #{tpu_custom_call.1} parent=0
    _
  %s4 = ssub.s32 1, %s2
  %s5 = scalar_select 0, %s4, %s2
  $region1: #{tpu_custom_call.1} parent=0
    #allocation2 [shape = 'u8[4096]{0}', space=vmem, size = 0x1000, scoped, tag = 'input window, operand 0, single buffered']
    #allocation3 [shape = 's32[1]{0}', space=sflag, size = 0x4, scoped, tag = 'scoped memory for tpu_custom_call.1']
    #allocation4 [shape = 's32[1]{0}', space=sflag, size = 0x4, scoped, tag = 'scoped memory for tpu_custom_call.1']
    #allocation5 [shape = 'u8[4096]{0}', space=vmem, size = 0x1000, scoped, tag = 'output window, operand 0, single buffered']
    %6 = vsyncpa [#allocation3], 0
    %7 = vsyncpa [#allocation4], 0
    // Predicated region
    $region2: #{tpu_custom_call.1} parent=1 // pred_check
      _
    $region3: #{tpu_custom_call.1} parent=1 // pred_check_branch
      %9 = sbr.rel (0) target = $region5
    $region4: #{tpu_custom_call.1} parent=1 // pred_region
      %s11 = ssub.s32 128, 128
      %12 = vsyncadd [#allocation3], %s11
      %s14 = sshll.u32 [#allocation2], 4
      %s15 = int_to_ptr.vmem [resolvable:$true] %s14
      %17 = dma.hbm_to_vmem [thread:$0]  %s0, 128, %s15, [#allocation3]
    $region5: #{tpu_custom_call.1} parent=1 // pred_fallthru
      _
    // Predicated region
    $region6: #{tpu_custom_call.1} parent=1 // pred_check
      _
    $region7: #{tpu_custom_call.1} parent=1 // pred_check_branch
      %19 = sbr.rel (0) target = $region9
    $region8: #{tpu_custom_call.1} parent=1 // pred_region
      %20 = dma.done [#allocation3], 128
    $region9: #{tpu_custom_call.1} parent=1 // pred_fallthru
      _
    %v21 = vld [vmem:[#allocation2] sm:$0xff]
    %22 = vrot.lane.b32.xlu0 %v21, 1
    %v23 = vpop.permute.xlu0 %22
    %24 = vst [vmem:[#allocation5] sm:$0xff] %v23
    // Predicated region
    $region10: #{tpu_custom_call.1} parent=1 // pred_check
      _
    $region11: #{tpu_custom_call.1} parent=1 // pred_check_branch
      %26 = sbr.rel (0) target = $region13
    $region12: #{tpu_custom_call.1} parent=1 // pred_region
      %s28 = ssub.s32 128, 128
      %29 = vsyncadd [#allocation4], %s28
      %s31 = sshll.u32 [#allocation5], 4
      %s32 = int_to_ptr.vmem [resolvable:$true] %s31
      %34 = dma.vmem_to_hbm [thread:$0]  %s32, 128, %s1, [#allocation4]
    $region13: #{tpu_custom_call.1} parent=1 // pred_fallthru
      _
    // Predicated region
    $region14: #{tpu_custom_call.1} parent=1 // pred_check
      _
    $region15: #{tpu_custom_call.1} parent=1 // pred_check_branch
      %36 = sbr.rel (0) target = $region17
    $region16: #{tpu_custom_call.1} parent=1 // pred_region
      %37 = dma.done [#allocation4], 128
    $region17: #{tpu_custom_call.1} parent=1 // pred_fallthru
      _
    %38 = vsyncpa [#allocation3], 1
    %39 = vsyncpa [#allocation4], 1

</llo_original>
